<compile_context>
chip_gen: v7x
topology: tpu7x:2x2x1
jax: 0.10.0
libtpu: 0.0.40
codegen_flags: <defaults>
</compile_context>

<pallas_src>
import functools

import jax
import jax.numpy as jnp
from jax.experimental import pallas as pl
from jax.experimental.pallas import tpu as pltpu

# ---- synthetic config (mirrors config.MODEL.*) ------------------------------
DIM_INNER = 128          # config.MODEL.HIT_STRUCTURE.DIM_INNER  (fc1 input dim)
MLP_HEAD_DIM = 128       # head_cfg.MLP_HEAD_DIM (representation_size)
POOLER_RESOLUTION = 8    # head_cfg.POOLER_RESOLUTION
HIT_ACTIVE = False       # config.MODEL.HIT_STRUCTURE.ACTIVE


def _round_up(x, m):
    return ((x + m - 1) // m) * m


def _tpu_vmem_capacity_bytes():
    try:
        return int(pltpu.get_tpu_info().vmem_capacity_bytes)
    except Exception:
        return 64 << 20            # conservative fallback (v7x per-TC VMEM)


# Per-generation tiling: v7x (64 MiB VMEM/TC) -> tn<=128 rows, 48 MiB scoped
# limit; v5e/v6e (128 MiB physical) -> tn<=256 rows with a raised scoped limit.
# bf16 input row = T*HW*C*2 = 64 KiB -> tn=128 is ~16 MiB double-buffered.
_VMEM_CAP = _tpu_vmem_capacity_bytes()
if _VMEM_CAP >= (96 << 20):
    ROW_TILE, VMEM_LIMIT_BYTES = 256, 64 << 20     # v5e / v6e
else:
    ROW_TILE, VMEM_LIMIT_BYTES = 128, 48 << 20     # v7x


def _pick_row_tile(n_rows):
    if n_rows <= 16:
        return n_rows              # single block; block dim == full array dim
    # >= 2 grid steps so the "parallel" axis can shard across v7x's 2 TCs.
    return min(ROW_TILE, _round_up(pl.cdiv(n_rows, 2), 8))


# ---- fused Pallas kernel: pool (mean_T, max_HW) -> fc1 -> ReLU -> fc2 -> ReLU
def _fused_pool_mlp_kernel(x_ref, w1_ref, b1_ref, w2_ref, b2_ref,
                           pooled_ref, mlp_ref, *, inv_t):
    # x_ref block: (tn, T, HW, C) channels-last, native dtype (bf16/f32).
    # Trailing dims (HW=64, C=128) are padding-free in (8,128) tiles.
    T = x_ref.shape[1]
    # roi_pooling's .mean(dim=2): accumulate the T slices in f32 (VALU adds over
    # a major axis; no full f32 copy of the tile is materialized).
    acc = x_ref[:, 0].astype(jnp.float32)
    for t in range(1, T):
        acc = acc + x_ref[:, t].astype(jnp.float32)
    m = acc * inv_t                                          # (tn, HW, C) f32
    # nn.MaxPool3d((1, res, res)) over the full window: sublane reduction.
    # Result is lane-dense in C -> feeds the MXU with no relayout.
    pooled = jnp.max(m, axis=1)                              # (tn, C)
    pooled_ref[...] = pooled

    # MLP head on x_after = person_pooled.view(N, -1) == pooled.
    # bf16 operands (MXU native), f32 accumulation, f32 bias/ReLU.
    h = jnp.dot(pooled.astype(jnp.bfloat16), w1_ref[...],
                preferred_element_type=jnp.float32) + b1_ref[...]
    h = jnp.maximum(h, 0.0)
    o = jnp.dot(h.astype(jnp.bfloat16), w2_ref[...],
                preferred_element_type=jnp.float32) + b2_ref[...]
    mlp_ref[...] = jnp.maximum(o, 0.0)


def fused_pool_mlp(feat_nthwc, w1_bf16, b1, w2_bf16, b2):
    """Fused pooling + MLP head.

    feat_nthwc: (N, T, H, W, C) channels-last, native dtype (bf16 or f32).
    Returns (pooled (N, C) f32, mlp_out (N, R) f32).
    """
    N, T, H, W, C = feat_nthwc.shape
    R = w1_bf16.shape[1]
    # Contiguous trailing-dim merge: free reshape, no transpose, no upcast.
    x = feat_nthwc.reshape(N, T, H * W, C)

    tn = _pick_row_tile(N)
    grid = (pl.cdiv(N, tn),)
    const2 = lambda i: (0, 0)                 # weights/bias resident across steps

    itemsize = jnp.dtype(x.dtype).itemsize
    bytes_in = N * T * H * W * C * itemsize
    bytes_w = (w1_bf16.size + w2_bf16.size) * 2 + (b1.size + b2.size) * 4
    bytes_out = N * C * 4 + N * R * 4
    flops = N * (T + 1) * H * W * C + 2 * N * R * (C + R)

    pooled, mlp_out = pl.pallas_call(
        functools.partial(_fused_pool_mlp_kernel, inv_t=1.0 / T),
        out_shape=(jax.ShapeDtypeStruct((N, C), jnp.float32),
                   jax.ShapeDtypeStruct((N, R), jnp.float32)),
        grid=grid,
        in_specs=[
            pl.BlockSpec((tn, T, H * W, C), lambda i: (i, 0, 0, 0)),
            pl.BlockSpec((C, R), const2),     # w1 (bf16), stays in VMEM
            pl.BlockSpec((1, R), const2),     # b1
            pl.BlockSpec((R, R), const2),     # w2 (bf16), stays in VMEM
            pl.BlockSpec((1, R), const2),     # b2
        ],
        out_specs=(pl.BlockSpec((tn, C), lambda i: (i, 0)),
                   pl.BlockSpec((tn, R), lambda i: (i, 0))),
        compiler_params=pltpu.CompilerParams(
            dimension_semantics=("parallel",),      # shard row tiles on v7x 2 TCs
            vmem_limit_bytes=VMEM_LIMIT_BYTES),
        cost_estimate=pl.CostEstimate(
            flops=int(flops), transcendentals=0,
            bytes_accessed=int(bytes_in + bytes_w + bytes_out)),
    )(x, w1_bf16,
      b1.reshape(1, R).astype(jnp.float32),
      w2_bf16,
      b2.reshape(1, R).astype(jnp.float32))
    return pooled, mlp_out


# ---- the module --------------------------------------------------------------
class MLPFeatureExtractor:
    def __init__(self, key):
        self.dim_in = DIM_INNER
        representation_size = MLP_HEAD_DIM
        fc1_dim_in = self.dim_in  # HIT inactive -> no concat fusion widening

        k1, k2, k3, k4 = jax.random.split(key, 4)

        def kaiming_uniform_a1(k, fan_in, fan_out):
            # nn.init.kaiming_uniform_(w, a=1): gain = sqrt(2/(1+1)) = 1
            bound = (3.0 / fan_in) ** 0.5
            return jax.random.uniform(k, (fan_in, fan_out), jnp.float32, -bound, bound)

        # fc1 / fc2 : kaiming_uniform_(a=1) weight, zero bias (as in __init__).
        # Stored transposed, i.e. (in_features, out_features).
        self.w1 = kaiming_uniform_a1(k1, fc1_dim_in, representation_size)
        self.b1 = jnp.zeros((representation_size,), jnp.float32)
        self.w2 = kaiming_uniform_a1(k2, representation_size, representation_size)
        self.b2 = jnp.zeros((representation_size,), jnp.float32)
        # bf16 copies fed to the MXU (halves weight DMA, f32 accumulation kept).
        self.w1_bf16 = self.w1.astype(jnp.bfloat16)
        self.w2_bf16 = self.w2.astype(jnp.bfloat16)
        # fc3 = nn.Linear(11, 8): defined by the module but never used in forward.
        bound3 = 1.0 / (11.0 ** 0.5)
        self.w3 = jax.random.uniform(k3, (11, 8), jnp.float32, -bound3, bound3)
        self.b3 = jax.random.uniform(k4, (8,), jnp.float32, -bound3, bound3)

        self.dim_out = representation_size
        # TODO(synk): self.hit_structure / self.clip (CLIPencoder) not modeled.

    @staticmethod
    def to_channels_last(feat_ncthw):
        """One-time layout change for producers that emit NCTHW.
        The fused kernel streams channels-last (N, T, H, W, C)."""
        return jnp.transpose(feat_ncthw, (0, 2, 3, 4, 1))

    def pool_and_head(self, raw_feat_nthwc):
        """roi_pooling temporal mean + max_pooling_zero_safe + fc1/fc2 head,
        fused in one Pallas kernel.  Input is channels-last (N, T, H, W, C).
        Returns (person_pooled (N, C, 1, 1, 1), mlp (N, R))."""
        N, T, H, W, C = raw_feat_nthwc.shape
        res = POOLER_RESOLUTION
        if N == 0:
            # max_pooling_zero_safe path (shape kept identical to the reference)
            pooled5d = jnp.zeros((0, C, 1, H - res + 1, W - res + 1), jnp.float32)
            return pooled5d, jnp.zeros((0, self.dim_out), jnp.float32)
        assert H == res and W == res, "only the H == W == POOLER_RESOLUTION case is modeled"
        pooled, mlp_out = fused_pool_mlp(raw_feat_nthwc, self.w1_bf16, self.b1,
                                         self.w2_bf16, self.b2)
        return pooled.reshape(N, C, 1, 1, 1), mlp_out

    # exact reproduction of forward() for part_forward != 1, HIT inactive
    def forward(self, image_feature, person_feature, object_feature,
                proposals=None, objects=None, extras=None, part_forward=-1):
        person_pooled = person_feature
        object_pooled = object_feature
        scene_pooled = image_feature
        if object_pooled is not None and object_pooled.shape[0] == 0:
            object_pooled = None
        x_after = person_pooled
        scene_pooled = scene_pooled[:, None, ...]          # .unsqueeze(1)
        # TODO(synk): ia_active branch (get_memory_feature + hit_structure) skipped.
        x_after = x_after.reshape(x_after.shape[0], -1)    # .view(N, -1)
        return x_after, person_pooled, object_pooled, scene_pooled


# ---- demo / smoke test --------------------------------------------------------
if __name__ == "__main__":
    key = jax.random.PRNGKey(0)
    kp, ko, ks, kw = jax.random.split(key, 4)

    N, C, T, H, W = 4, DIM_INNER, 4, POOLER_RESOLUTION, POOLER_RESOLUTION
    # Producer emits channels-last (N, T, H, W, C) in bf16 (native streaming dtype).
    raw_person = jax.random.normal(kp, (N, T, H, W, C), jnp.float32).astype(jnp.bfloat16)
    object_pooled_in = jax.random.normal(ko, (3, C, 1, 1, 1), jnp.float32)
    image_feature = jax.random.normal(ks, (2, C), jnp.float32)            # scene feature

    model = MLPFeatureExtractor(kw)

    # single fused Pallas kernel: pool -> fc1 -> ReLU -> fc2 -> ReLU
    person_pooled, mlp_out = model.pool_and_head(raw_person)

    # forward pass (HIT inactive path; glue is pure reshapes)
    x_after, person_out, object_out, scene_pooled = model.forward(
        image_feature, person_pooled, object_pooled_in)

    jax.block_until_ready((person_pooled, mlp_out, x_after, object_out, scene_pooled))

    # ---- correctness checks vs plain-JAX references ---------------------------
    # pooling (f32 accumulation over the bf16 input, same as the kernel)
    feat_f32 = raw_person.astype(jnp.float32)
    pool_ref = jnp.max(jnp.mean(feat_f32, axis=1), axis=(1, 2))            # (N, C)
    assert jnp.allclose(person_pooled.reshape(N, C), pool_ref, atol=1e-5, rtol=1e-5)
    assert jnp.allclose(x_after, pool_ref, atol=1e-5, rtol=1e-5)

    # MLP head: bf16-matched reference (same operand casts, f32 accumulation)
    h_bf = jnp.dot(pool_ref.astype(jnp.bfloat16), model.w1_bf16,
                   preferred_element_type=jnp.float32) + model.b1
    h_bf = jnp.maximum(h_bf, 0.0)
    mlp_ref_bf = jnp.maximum(
        jnp.dot(h_bf.astype(jnp.bfloat16), model.w2_bf16,
                preferred_element_type=jnp.float32) + model.b2, 0.0)
    assert jnp.allclose(mlp_out, mlp_ref_bf, atol=3e-2, rtol=3e-2)

    # and a looser check against the full-f32 module reference
    h_f32 = jnp.maximum(pool_ref @ model.w1 + model.b1, 0.0)
    mlp_ref_f32 = jnp.maximum(h_f32 @ model.w2 + model.b2, 0.0)
    assert jnp.allclose(mlp_out, mlp_ref_f32, atol=6e-2, rtol=6e-2)

    # forward() output shapes / glue
    assert x_after.shape == (N, C)
    assert person_out.shape == (N, C, 1, 1, 1)
    assert object_out.shape == (3, C, 1, 1, 1)
    assert scene_pooled.shape == (2, 1, C)
    assert mlp_out.shape == (N, MLP_HEAD_DIM)

    # zero-safe path (max_pooling_zero_safe)
    empty_pooled, empty_mlp = model.pool_and_head(
        jnp.zeros((0, T, H, W, C), jnp.bfloat16))
    assert empty_pooled.shape == (0, C, 1, H - POOLER_RESOLUTION + 1,
                                  W - POOLER_RESOLUTION + 1)
    assert empty_mlp.shape == (0, MLP_HEAD_DIM)

    print("KERNEL_OK")
</pallas_src>

<mosaic_0001>
module attributes {stable_mosaic.version = 11 : i64} {
  func.func @_fused_pool_mlp_kernel(%arg0: i32, %arg1: memref<4x4x64x128xbf16, #tpu.memory_space<vmem>>, %arg2: memref<128x128xbf16, #tpu.memory_space<vmem>>, %arg3: memref<1x128xf32, #tpu.memory_space<vmem>>, %arg4: memref<128x128xbf16, #tpu.memory_space<vmem>>, %arg5: memref<1x128xf32, #tpu.memory_space<vmem>>, %arg6: memref<4x128xf32, #tpu.memory_space<vmem>>, %arg7: memref<4x128xf32, #tpu.memory_space<vmem>>) attributes {dimension_semantics = [#tpu.dimension_semantics<parallel>], iteration_bounds = array<i64: 1>, scalar_prefetch = 0 : i64, scratch_operands = 0 : i64, tpu.core_type = #tpu.core_type<tc>, window_params = [{transform_indices = @transform_0, window_bounds = array<i64: 4, 4, 64, 128>}, {pipeline_mode = #tpu.pipeline_mode<synchronous>, transform_indices = @transform_1, window_bounds = array<i64: 128, 128>}, {pipeline_mode = #tpu.pipeline_mode<synchronous>, transform_indices = @transform_2, window_bounds = array<i64: 1, 128>}, {pipeline_mode = #tpu.pipeline_mode<synchronous>, transform_indices = @transform_3, window_bounds = array<i64: 128, 128>}, {pipeline_mode = #tpu.pipeline_mode<synchronous>, transform_indices = @transform_4, window_bounds = array<i64: 1, 128>}, {transform_indices = @transform_5, window_bounds = array<i64: 4, 128>}, {transform_indices = @transform_6, window_bounds = array<i64: 4, 128>}]} {
    %c0 = arith.constant 0 : index
    %c0_0 = arith.constant 0 : index
    %c0_1 = arith.constant 0 : index
    %c0_2 = arith.constant 0 : index
    %0 = vector.load %arg1[%c0, %c0_0, %c0_1, %c0_2] : memref<4x4x64x128xbf16, #tpu.memory_space<vmem>>, vector<4x1x64x128xbf16>
    %1 = vector.shape_cast %0 : vector<4x1x64x128xbf16> to vector<4x64x128xbf16>
    %2 = arith.extf %1 : vector<4x64x128xbf16> to vector<4x64x128xf32>
    %c0_3 = arith.constant 0 : index
    %c1 = arith.constant 1 : index
    %c0_4 = arith.constant 0 : index
    %c0_5 = arith.constant 0 : index
    %3 = vector.load %arg1[%c0_3, %c1, %c0_4, %c0_5] : memref<4x4x64x128xbf16, #tpu.memory_space<vmem>>, vector<4x1x64x128xbf16>
    %4 = vector.shape_cast %3 : vector<4x1x64x128xbf16> to vector<4x64x128xbf16>
    %5 = arith.extf %4 : vector<4x64x128xbf16> to vector<4x64x128xf32>
    %6 = arith.addf %2, %5 : vector<4x64x128xf32>
    %c0_6 = arith.constant 0 : index
    %c2 = arith.constant 2 : index
    %c0_7 = arith.constant 0 : index
    %c0_8 = arith.constant 0 : index
    %7 = vector.load %arg1[%c0_6, %c2, %c0_7, %c0_8] : memref<4x4x64x128xbf16, #tpu.memory_space<vmem>>, vector<4x1x64x128xbf16>
    %8 = vector.shape_cast %7 : vector<4x1x64x128xbf16> to vector<4x64x128xbf16>
    %9 = arith.extf %8 : vector<4x64x128xbf16> to vector<4x64x128xf32>
    %10 = arith.addf %6, %9 : vector<4x64x128xf32>
    %c0_9 = arith.constant 0 : index
    %c3 = arith.constant 3 : index
    %c0_10 = arith.constant 0 : index
    %c0_11 = arith.constant 0 : index
    %11 = vector.load %arg1[%c0_9, %c3, %c0_10, %c0_11] : memref<4x4x64x128xbf16, #tpu.memory_space<vmem>>, vector<4x1x64x128xbf16>
    %12 = vector.shape_cast %11 : vector<4x1x64x128xbf16> to vector<4x64x128xbf16>
    %13 = arith.extf %12 : vector<4x64x128xbf16> to vector<4x64x128xf32>
    %14 = arith.addf %10, %13 : vector<4x64x128xf32>
    %cst = arith.constant 2.500000e-01 : f32
    %15 = vector.broadcast %cst : f32 to vector<4x64x128xf32>
    %16 = arith.mulf %14, %15 : vector<4x64x128xf32>
    %cst_12 = arith.constant dense<0xFF800000> : vector<4x128xf32>
    %17 = vector.multi_reduction <maximumf>, %16, %cst_12 [1] : vector<4x64x128xf32> to vector<4x128xf32>
    %c0_13 = arith.constant 0 : index
    %c0_14 = arith.constant 0 : index
    %18 = vector.load %arg6[%c0_13, %c0_14] : memref<4x128xf32, #tpu.memory_space<vmem>>, vector<4x128xf32>
    tpu.vector_store %arg6[%c0_13, %c0_14], %17 {strides = array<i32>} : memref<4x128xf32, #tpu.memory_space<vmem>>, vector<4x128xf32>,
    %19 = arith.truncf %17 : vector<4x128xf32> to vector<4x128xbf16>
    %c0_15 = arith.constant 0 : index
    %c0_16 = arith.constant 0 : index
    %20 = vector.load %arg2[%c0_15, %c0_16] : memref<128x128xbf16, #tpu.memory_space<vmem>>, vector<128x128xbf16>
    %cst_17 = arith.constant dense<0.000000e+00> : vector<4x128xf32>
    %21 = tpu.matmul %19, %20, %cst_17 {dimension_numbers = #tpu.dot_dimension_numbers<[1], [0], [0], [1], [0, 0, 1, 1], [], []>} : vector<4x128xbf16>, vector<128x128xbf16>, vector<4x128xf32> -> vector<4x128xf32>
    %c0_18 = arith.constant 0 : index
    %c0_19 = arith.constant 0 : index
    %22 = vector.load %arg3[%c0_18, %c0_19] : memref<1x128xf32, #tpu.memory_space<vmem>>, vector<1x128xf32>
    %23 = vector.broadcast %22 : vector<1x128xf32> to vector<4x128xf32>
    %24 = arith.addf %21, %23 : vector<4x128xf32>
    %cst_20 = arith.constant 0.000000e+00 : f32
    %25 = vector.broadcast %cst_20 : f32 to vector<4x128xf32>
    %26 = arith.maximumf %24, %25 : vector<4x128xf32>
    %27 = arith.truncf %26 : vector<4x128xf32> to vector<4x128xbf16>
    %c0_21 = arith.constant 0 : index
    %c0_22 = arith.constant 0 : index
    %28 = vector.load %arg4[%c0_21, %c0_22] : memref<128x128xbf16, #tpu.memory_space<vmem>>, vector<128x128xbf16>
    %cst_23 = arith.constant dense<0.000000e+00> : vector<4x128xf32>
    %29 = tpu.matmul %27, %28, %cst_23 {dimension_numbers = #tpu.dot_dimension_numbers<[1], [0], [0], [1], [0, 0, 1, 1], [], []>} : vector<4x128xbf16>, vector<128x128xbf16>, vector<4x128xf32> -> vector<4x128xf32>
    %c0_24 = arith.constant 0 : index
    %c0_25 = arith.constant 0 : index
    %30 = vector.load %arg5[%c0_24, %c0_25] : memref<1x128xf32, #tpu.memory_space<vmem>>, vector<1x128xf32>
    %31 = vector.broadcast %30 : vector<1x128xf32> to vector<4x128xf32>
    %32 = arith.addf %29, %31 : vector<4x128xf32>
    %cst_26 = arith.constant 0.000000e+00 : f32
    %33 = vector.broadcast %cst_26 : f32 to vector<4x128xf32>
    %34 = arith.maximumf %32, %33 : vector<4x128xf32>
    %c0_27 = arith.constant 0 : index
    %c0_28 = arith.constant 0 : index
    %35 = vector.load %arg7[%c0_27, %c0_28] : memref<4x128xf32, #tpu.memory_space<vmem>>, vector<4x128xf32>
    tpu.vector_store %arg7[%c0_27, %c0_28], %34 {strides = array<i32>} : memref<4x128xf32, #tpu.memory_space<vmem>>, vector<4x128xf32>,
    return
  }
  func.func @transform_0(%arg0: i32) -> (i32, i32, i32, i32) {
    %c0_i32 = arith.constant 0 : i32
    %c0_i32_0 = arith.constant 0 : i32
    %c0_i32_1 = arith.constant 0 : i32
    %c0_i32_2 = arith.constant 0 : i32
    return %arg0, %c0_i32, %c0_i32_0, %c0_i32_1 : i32, i32, i32, i32
  }
  func.func @transform_1(%arg0: i32) -> (i32, i32) {
    %c0_i32 = arith.constant 0 : i32
    %c0_i32_0 = arith.constant 0 : i32
    %c0_i32_1 = arith.constant 0 : i32
    return %c0_i32, %c0_i32_0 : i32, i32
  }
  func.func @transform_2(%arg0: i32) -> (i32, i32) {
    %c0_i32 = arith.constant 0 : i32
    %c0_i32_0 = arith.constant 0 : i32
    %c0_i32_1 = arith.constant 0 : i32
    return %c0_i32, %c0_i32_0 : i32, i32
  }
  func.func @transform_3(%arg0: i32) -> (i32, i32) {
    %c0_i32 = arith.constant 0 : i32
    %c0_i32_0 = arith.constant 0 : i32
    %c0_i32_1 = arith.constant 0 : i32
    return %c0_i32, %c0_i32_0 : i32, i32
  }
  func.func @transform_4(%arg0: i32) -> (i32, i32) {
    %c0_i32 = arith.constant 0 : i32
    %c0_i32_0 = arith.constant 0 : i32
    %c0_i32_1 = arith.constant 0 : i32
    return %c0_i32, %c0_i32_0 : i32, i32
  }
  func.func @transform_5(%arg0: i32) -> (i32, i32) {
    %c0_i32 = arith.constant 0 : i32
    %c0_i32_0 = arith.constant 0 : i32
    return %arg0, %c0_i32 : i32, i32
  }
  func.func @transform_6(%arg0: i32) -> (i32, i32) {
    %c0_i32 = arith.constant 0 : i32
    %c0_i32_0 = arith.constant 0 : i32
    return %arg0, %c0_i32 : i32, i32
  }
}

</mosaic_0001>

<llo_original>
// kernel: tpu_custom_call.1
$region0: #{tpu_custom_call.1}
  #allocation0 [shape = 'u32[]', space=smem, size = 0x4, offset = 0x4, fixed_abs, tag = 'smem constant byte address 0x4 - core index']
  #allocation1 [shape = 'u32[144,128]{1,0:T(1,128)}', space=vmem, size = 0x12000, scoped, tag = 'internal scratch']
  %s0 = inlined_call_operand.hbm [shape: bf16[4,4,64,128], index: 0, kind: input, shape index: {}]
  %s1 = inlined_call_operand.hbm [shape: bf16[128,128], index: 1, kind: input, shape index: {}]
  %s2 = inlined_call_operand.vmem [shape: f32[1,128], index: 2, kind: input, shape index: {}]
  %s3 = inlined_call_operand.hbm [shape: bf16[128,128], index: 3, kind: input, shape index: {}]
  %s4 = inlined_call_operand.vmem [shape: f32[1,128], index: 4, kind: input, shape index: {}]
  %s5 = inlined_call_operand.hbm [shape: f32[4,128], index: 5, kind: output, shape index: {0}]
  %s6 = inlined_call_operand.hbm [shape: f32[4,128], index: 6, kind: output, shape index: {1}]
  %7 = xla_tuple %s5, %s6
  %s8 = sld [smem:[#allocation0]]
  $region50: #{tpu_custom_call.1} parent=0
    _
  %s10 = ssub.s32 1, %s8
  %s11 = scalar_select 0, %s10, %s8
  $region1: #{tpu_custom_call.1} parent=0
    #allocation2 [shape = 'u8[262144]{0}', space=vmem, size = 0x40000, scoped, tag = 'input window, operand 0, single buffered']
    #allocation3 [shape = 's32[1]{0}', space=sflag, size = 0x4, scoped, tag = 'scoped memory for tpu_custom_call.1']
    #allocation4 [shape = 's32[1]{0}', space=sflag, size = 0x4, scoped, tag = 'scoped memory for tpu_custom_call.1']
    #allocation5 [shape = 'u8[32768]{0}', space=vmem, size = 0x8000, scoped, tag = 'input window, operand 1, single buffered']
    #allocation6 [shape = 's32[1]{0}', space=sflag, size = 0x4, scoped, tag = 'scoped memory for tpu_custom_call.1']
    #allocation7 [shape = 'u8[32768]{0}', space=vmem, size = 0x8000, scoped, tag = 'input window, operand 3, single buffered']
    #allocation8 [shape = 'u8[2048]{0}', space=vmem, size = 0x800, scoped, tag = 'output window, operand 0, single buffered']
    #allocation9 [shape = 'u8[2048]{0}', space=vmem, size = 0x800, scoped, tag = 'output window, operand 1, single buffered']
    #allocation10 [shape = 's32[1]{0}', space=sflag, size = 0x4, scoped, tag = 'scoped memory for tpu_custom_call.1']
    %12 = vsyncpa [#allocation3], 0
    %13 = vsyncpa [#allocation6], 0
    %14 = vsyncpa [#allocation4], 0
    %15 = vsyncpa [#allocation10], 0
    // Predicated region
    $region2: #{tpu_custom_call.1} parent=1 // pred_check
      _
    $region3: #{tpu_custom_call.1} parent=1 // pred_check_branch
      %17 = sbr.rel (0) target = $region5
    $region4: #{tpu_custom_call.1} parent=1 // pred_region
      %s19 = ssub.s32 8192, 8192
      %20 = vsyncadd [#allocation3], %s19
      %s21 = sshll.u32 [#allocation2], 4
      %s22 = int_to_ptr.vmem [resolvable:$true] %s21
      %27 = dma.hbm_to_vmem [thread:$0]  %s0, 8192, %s22, [#allocation3], 64, 64, 4
    $region5: #{tpu_custom_call.1} parent=1 // pred_fallthru
      _
    // Predicated region
    $region6: #{tpu_custom_call.1} parent=1 // pred_check
      _
    $region7: #{tpu_custom_call.1} parent=1 // pred_check_branch
      %29 = sbr.rel (0) target = $region9
    $region8: #{tpu_custom_call.1} parent=1 // pred_region
      %s31 = ssub.s32 1024, 1024
      %32 = vsyncadd [#allocation6], %s31
      %s33 = sshll.u32 [#allocation5], 4
      %s34 = int_to_ptr.vmem [resolvable:$true] %s33
      %39 = dma.hbm_to_vmem [thread:$0]  %s1, 1024, %s34, [#allocation6], 64, 64, 4
    $region9: #{tpu_custom_call.1} parent=1 // pred_fallthru
      _
    // Predicated region
    $region10: #{tpu_custom_call.1} parent=1 // pred_check
      _
    $region11: #{tpu_custom_call.1} parent=1 // pred_check_branch
      %41 = sbr.rel (0) target = $region13
    $region12: #{tpu_custom_call.1} parent=1 // pred_region
      _
    $region13: #{tpu_custom_call.1} parent=1 // pred_fallthru
      _
    // Predicated region
    $region14: #{tpu_custom_call.1} parent=1 // pred_check
      _
    $region15: #{tpu_custom_call.1} parent=1 // pred_check_branch
      %43 = sbr.rel (0) target = $region17
    $region16: #{tpu_custom_call.1} parent=1 // pred_region
      %s45 = ssub.s32 1024, 1024
      %46 = vsyncadd [#allocation6], %s45
      %s47 = sshll.u32 [#allocation7], 4
      %s48 = int_to_ptr.vmem [resolvable:$true] %s47
      %53 = dma.hbm_to_vmem [thread:$0]  %s3, 1024, %s48, [#allocation6], 64, 64, 4
    $region17: #{tpu_custom_call.1} parent=1 // pred_fallthru
      _
    // Predicated region
    $region18: #{tpu_custom_call.1} parent=1 // pred_check
      _
    $region19: #{tpu_custom_call.1} parent=1 // pred_check_branch
      %55 = sbr.rel (0) target = $region21
    $region20: #{tpu_custom_call.1} parent=1 // pred_region
      _
    $region21: #{tpu_custom_call.1} parent=1 // pred_fallthru
      _
    // Predicated region
    $region22: #{tpu_custom_call.1} parent=1 // pred_check
      _
    $region23: #{tpu_custom_call.1} parent=1 // pred_check_branch
      %57 = sbr.rel (0) target = $region25
    $region24: #{tpu_custom_call.1} parent=1 // pred_region
      %58 = dma.done [#allocation3], 8192
    $region25: #{tpu_custom_call.1} parent=1 // pred_fallthru
      _
    // Predicated region
    $region26: #{tpu_custom_call.1} parent=1 // pred_check
      _
    $region27: #{tpu_custom_call.1} parent=1 // pred_check_branch
      %60 = sbr.rel (0) target = $region29
    $region28: #{tpu_custom_call.1} parent=1 // pred_region
      %61 = dma.done [#allocation6], 1024
    $region29: #{tpu_custom_call.1} parent=1 // pred_fallthru
      _
    // Predicated region
    $region30: #{tpu_custom_call.1} parent=1 // pred_check
      _
    $region31: #{tpu_custom_call.1} parent=1 // pred_check_branch
      %63 = sbr.rel (0) target = $region33
    $region32: #{tpu_custom_call.1} parent=1 // pred_region
      %64 = dma.done [#allocation6], 1024
    $region33: #{tpu_custom_call.1} parent=1 // pred_fallthru
      _
    %v66 = vld [vmem:[#allocation2] sm:$0xf]
    %v67 = vld [vmem:[#allocation2 + $0x4] sm:$0xf]
    %v68 = vld [vmem:[#allocation2 + $0x8] sm:$0xf]
    %v69 = vld [vmem:[#allocation2 + $0xc] sm:$0xf]
    %v70 = vld [vmem:[#allocation2 + $0x10] sm:$0xf]
    %v71 = vld [vmem:[#allocation2 + $0x14] sm:$0xf]
    %v72 = vld [vmem:[#allocation2 + $0x18] sm:$0xf]
    %v73 = vld [vmem:[#allocation2 + $0x1c] sm:$0xf]
    %v74 = vld [vmem:[#allocation2 + $0x80] sm:$0xf]
    %v75 = vld [vmem:[#allocation2 + $0x84] sm:$0xf]
    %v76 = vld [vmem:[#allocation2 + $0x88] sm:$0xf]
    %v77 = vld [vmem:[#allocation2 + $0x8c] sm:$0xf]
    %v78 = vld [vmem:[#allocation2 + $0x90] sm:$0xf]
    %v79 = vld [vmem:[#allocation2 + $0x94] sm:$0xf]
    %v80 = vld [vmem:[#allocation2 + $0x98] sm:$0xf]
    %v81 = vld [vmem:[#allocation2 + $0x9c] sm:$0xf]
    %v82 = vld [vmem:[#allocation2 + $0x100] sm:$0xf]
    %v83 = vld [vmem:[#allocation2 + $0x104] sm:$0xf]
    %v84 = vld [vmem:[#allocation2 + $0x108] sm:$0xf]
    %v85 = vld [vmem:[#allocation2 + $0x10c] sm:$0xf]
    %v86 = vld [vmem:[#allocation2 + $0x110] sm:$0xf]
    %v87 = vld [vmem:[#allocation2 + $0x114] sm:$0xf]
    %v88 = vld [vmem:[#allocation2 + $0x118] sm:$0xf]
    %v89 = vld [vmem:[#allocation2 + $0x11c] sm:$0xf]
    %v90 = vld [vmem:[#allocation2 + $0x180] sm:$0xf]
    %v91 = vld [vmem:[#allocation2 + $0x184] sm:$0xf]
    %v92 = vld [vmem:[#allocation2 + $0x188] sm:$0xf]
    %v93 = vld [vmem:[#allocation2 + $0x18c] sm:$0xf]
    %v94 = vld [vmem:[#allocation2 + $0x190] sm:$0xf]
    %v95 = vld [vmem:[#allocation2 + $0x194] sm:$0xf]
    %v96 = vld [vmem:[#allocation2 + $0x198] sm:$0xf]
    %v97 = vld [vmem:[#allocation2 + $0x19c] sm:$0xf]
    %v98 = vunpack.c.l.bf16 %v66
    %v99 = vunpack.c.l.bf16 %v67
    %v100 = vunpack.c.l.bf16 %v68
    %v101 = vunpack.c.l.bf16 %v69
    %v102 = vunpack.c.l.bf16 %v70
    %v103 = vunpack.c.l.bf16 %v71
    %v104 = vunpack.c.l.bf16 %v72
    %v105 = vunpack.c.l.bf16 %v73
    %v106 = vunpack.c.l.bf16 %v74
    %v107 = vunpack.c.l.bf16 %v75
    %v108 = vunpack.c.l.bf16 %v76
    %v109 = vunpack.c.l.bf16 %v77
    %v110 = vunpack.c.l.bf16 %v78
    %v111 = vunpack.c.l.bf16 %v79
    %v112 = vunpack.c.l.bf16 %v80
    %v113 = vunpack.c.l.bf16 %v81
    %v114 = vunpack.c.l.bf16 %v82
    %v115 = vunpack.c.l.bf16 %v83
    %v116 = vunpack.c.l.bf16 %v84
    %v117 = vunpack.c.l.bf16 %v85
    %v118 = vunpack.c.l.bf16 %v86
    %v119 = vunpack.c.l.bf16 %v87
    %v120 = vunpack.c.l.bf16 %v88
    %v121 = vunpack.c.l.bf16 %v89
    %v122 = vunpack.c.l.bf16 %v90
    %v123 = vunpack.c.l.bf16 %v91
    %v124 = vunpack.c.l.bf16 %v92
    %v125 = vunpack.c.l.bf16 %v93
    %v126 = vunpack.c.l.bf16 %v94
    %v127 = vunpack.c.l.bf16 %v95
    %v128 = vunpack.c.l.bf16 %v96
    %v129 = vunpack.c.l.bf16 %v97
    %s130 = scalar_lea.vmem [#allocation2], 32
    %v131 = vld [vmem:[%s130] sm:$0xf]
    %v132 = vld [vmem:[%s130 + $0x4] sm:$0xf]
    %v133 = vld [vmem:[%s130 + $0x8] sm:$0xf]
    %v134 = vld [vmem:[%s130 + $0xc] sm:$0xf]
    %v135 = vld [vmem:[%s130 + $0x10] sm:$0xf]
    %v136 = vld [vmem:[%s130 + $0x14] sm:$0xf]
    %v137 = vld [vmem:[%s130 + $0x18] sm:$0xf]
    %v138 = vld [vmem:[%s130 + $0x1c] sm:$0xf]
    %v139 = vld [vmem:[%s130 + $0x80] sm:$0xf]
    %v140 = vld [vmem:[%s130 + $0x84] sm:$0xf]
    %v141 = vld [vmem:[%s130 + $0x88] sm:$0xf]
    %v142 = vld [vmem:[%s130 + $0x8c] sm:$0xf]
    %v143 = vld [vmem:[%s130 + $0x90] sm:$0xf]
    %v144 = vld [vmem:[%s130 + $0x94] sm:$0xf]
    %v145 = vld [vmem:[%s130 + $0x98] sm:$0xf]
    %v146 = vld [vmem:[%s130 + $0x9c] sm:$0xf]
    %v147 = vld [vmem:[%s130 + $0x100] sm:$0xf]
    %v148 = vld [vmem:[%s130 + $0x104] sm:$0xf]
    %v149 = vld [vmem:[%s130 + $0x108] sm:$0xf]
    %v150 = vld [vmem:[%s130 + $0x10c] sm:$0xf]
    %v151 = vld [vmem:[%s130 + $0x110] sm:$0xf]
    %v152 = vld [vmem:[%s130 + $0x114] sm:$0xf]
    %v153 = vld [vmem:[%s130 + $0x118] sm:$0xf]
    %v154 = vld [vmem:[%s130 + $0x11c] sm:$0xf]
    %v155 = vld [vmem:[%s130 + $0x180] sm:$0xf]
    %v156 = vld [vmem:[%s130 + $0x184] sm:$0xf]
    %v157 = vld [vmem:[%s130 + $0x188] sm:$0xf]
    %v158 = vld [vmem:[%s130 + $0x18c] sm:$0xf]
    %v159 = vld [vmem:[%s130 + $0x190] sm:$0xf]
    %v160 = vld [vmem:[%s130 + $0x194] sm:$0xf]
    %v161 = vld [vmem:[%s130 + $0x198] sm:$0xf]
    %v162 = vld [vmem:[%s130 + $0x19c] sm:$0xf]
    %v163 = vunpack.c.l.bf16 %v131
    %v164 = vunpack.c.l.bf16 %v132
    %v165 = vunpack.c.l.bf16 %v133
    %v166 = vunpack.c.l.bf16 %v134
    %v167 = vunpack.c.l.bf16 %v135
    %v168 = vunpack.c.l.bf16 %v136
    %v169 = vunpack.c.l.bf16 %v137
    %v170 = vunpack.c.l.bf16 %v138
    %v171 = vunpack.c.l.bf16 %v139
    %v172 = vunpack.c.l.bf16 %v140
    %v173 = vunpack.c.l.bf16 %v141
    %v174 = vunpack.c.l.bf16 %v142
    %v175 = vunpack.c.l.bf16 %v143
    %v176 = vunpack.c.l.bf16 %v144
    %v177 = vunpack.c.l.bf16 %v145
    %v178 = vunpack.c.l.bf16 %v146
    %v179 = vunpack.c.l.bf16 %v147
    %v180 = vunpack.c.l.bf16 %v148
    %v181 = vunpack.c.l.bf16 %v149
    %v182 = vunpack.c.l.bf16 %v150
    %v183 = vunpack.c.l.bf16 %v151
    %v184 = vunpack.c.l.bf16 %v152
    %v185 = vunpack.c.l.bf16 %v153
    %v186 = vunpack.c.l.bf16 %v154
    %v187 = vunpack.c.l.bf16 %v155
    %v188 = vunpack.c.l.bf16 %v156
    %v189 = vunpack.c.l.bf16 %v157
    %v190 = vunpack.c.l.bf16 %v158
    %v191 = vunpack.c.l.bf16 %v159
    %v192 = vunpack.c.l.bf16 %v160
    %v193 = vunpack.c.l.bf16 %v161
    %v194 = vunpack.c.l.bf16 %v162
    %v195 = vadd.f32 %v98, %v163
    %v196 = vadd.f32 %v99, %v164
    %v197 = vadd.f32 %v100, %v165
    %v198 = vadd.f32 %v101, %v166
    %v199 = vadd.f32 %v102, %v167
    %v200 = vadd.f32 %v103, %v168
    %v201 = vadd.f32 %v104, %v169
    %v202 = vadd.f32 %v105, %v170
    %v203 = vadd.f32 %v106, %v171
    %v204 = vadd.f32 %v107, %v172
    %v205 = vadd.f32 %v108, %v173
    %v206 = vadd.f32 %v109, %v174
    %v207 = vadd.f32 %v110, %v175
    %v208 = vadd.f32 %v111, %v176
    %v209 = vadd.f32 %v112, %v177
    %v210 = vadd.f32 %v113, %v178
    %v211 = vadd.f32 %v114, %v179
    %v212 = vadd.f32 %v115, %v180
    %v213 = vadd.f32 %v116, %v181
    %v214 = vadd.f32 %v117, %v182
    %v215 = vadd.f32 %v118, %v183
    %v216 = vadd.f32 %v119, %v184
    %v217 = vadd.f32 %v120, %v185
    %v218 = vadd.f32 %v121, %v186
    %v219 = vadd.f32 %v122, %v187
    %v220 = vadd.f32 %v123, %v188
    %v221 = vadd.f32 %v124, %v189
    %v222 = vadd.f32 %v125, %v190
    %v223 = vadd.f32 %v126, %v191
    %v224 = vadd.f32 %v127, %v192
    %v225 = vadd.f32 %v128, %v193
    %v226 = vadd.f32 %v129, %v194
    %s227 = scalar_lea.vmem [#allocation2], 64
    %v228 = vld [vmem:[%s227] sm:$0xf]
    %v229 = vld [vmem:[%s227 + $0x4] sm:$0xf]
    %v230 = vld [vmem:[%s227 + $0x8] sm:$0xf]
    %v231 = vld [vmem:[%s227 + $0xc] sm:$0xf]
    %v232 = vld [vmem:[%s227 + $0x10] sm:$0xf]
    %v233 = vld [vmem:[%s227 + $0x14] sm:$0xf]
    %v234 = vld [vmem:[%s227 + $0x18] sm:$0xf]
    %v235 = vld [vmem:[%s227 + $0x1c] sm:$0xf]
    %v236 = vld [vmem:[%s227 + $0x80] sm:$0xf]
    %v237 = vld [vmem:[%s227 + $0x84] sm:$0xf]
    %v238 = vld [vmem:[%s227 + $0x88] sm:$0xf]
    %v239 = vld [vmem:[%s227 + $0x8c] sm:$0xf]
    %v240 = vld [vmem:[%s227 + $0x90] sm:$0xf]
    %v241 = vld [vmem:[%s227 + $0x94] sm:$0xf]
    %v242 = vld [vmem:[%s227 + $0x98] sm:$0xf]
    %v243 = vld [vmem:[%s227 + $0x9c] sm:$0xf]
    %v244 = vld [vmem:[%s227 + $0x100] sm:$0xf]
    %v245 = vld [vmem:[%s227 + $0x104] sm:$0xf]
    %v246 = vld [vmem:[%s227 + $0x108] sm:$0xf]
    %v247 = vld [vmem:[%s227 + $0x10c] sm:$0xf]
    %v248 = vld [vmem:[%s227 + $0x110] sm:$0xf]
    %v249 = vld [vmem:[%s227 + $0x114] sm:$0xf]
    %v250 = vld [vmem:[%s227 + $0x118] sm:$0xf]
    %v251 = vld [vmem:[%s227 + $0x11c] sm:$0xf]
    %v252 = vld [vmem:[%s227 + $0x180] sm:$0xf]
    %v253 = vld [vmem:[%s227 + $0x184] sm:$0xf]
    %v254 = vld [vmem:[%s227 + $0x188] sm:$0xf]
    %v255 = vld [vmem:[%s227 + $0x18c] sm:$0xf]
    %v256 = vld [vmem:[%s227 + $0x190] sm:$0xf]
    %v257 = vld [vmem:[%s227 + $0x194] sm:$0xf]
    %v258 = vld [vmem:[%s227 + $0x198] sm:$0xf]
    %v259 = vld [vmem:[%s227 + $0x19c] sm:$0xf]
    %v260 = vunpack.c.l.bf16 %v228
    %v261 = vunpack.c.l.bf16 %v229
    %v262 = vunpack.c.l.bf16 %v230
    %v263 = vunpack.c.l.bf16 %v231
    %v264 = vunpack.c.l.bf16 %v232
    %v265 = vunpack.c.l.bf16 %v233
    %v266 = vunpack.c.l.bf16 %v234
    %v267 = vunpack.c.l.bf16 %v235
    %v268 = vunpack.c.l.bf16 %v236
    %v269 = vunpack.c.l.bf16 %v237
    %v270 = vunpack.c.l.bf16 %v238
    %v271 = vunpack.c.l.bf16 %v239
    %v272 = vunpack.c.l.bf16 %v240
    %v273 = vunpack.c.l.bf16 %v241
    %v274 = vunpack.c.l.bf16 %v242
    %v275 = vunpack.c.l.bf16 %v243
    %v276 = vunpack.c.l.bf16 %v244
    %v277 = vunpack.c.l.bf16 %v245
    %v278 = vunpack.c.l.bf16 %v246
    %v279 = vunpack.c.l.bf16 %v247
    %v280 = vunpack.c.l.bf16 %v248
    %v281 = vunpack.c.l.bf16 %v249
    %v282 = vunpack.c.l.bf16 %v250
    %v283 = vunpack.c.l.bf16 %v251
    %v284 = vunpack.c.l.bf16 %v252
    %v285 = vunpack.c.l.bf16 %v253
    %v286 = vunpack.c.l.bf16 %v254
    %v287 = vunpack.c.l.bf16 %v255
    %v288 = vunpack.c.l.bf16 %v256
    %v289 = vunpack.c.l.bf16 %v257
    %v290 = vunpack.c.l.bf16 %v258
    %v291 = vunpack.c.l.bf16 %v259
    %v292 = vadd.f32 %v195, %v260
    %v293 = vadd.f32 %v196, %v261
    %v294 = vadd.f32 %v197, %v262
    %v295 = vadd.f32 %v198, %v263
    %v296 = vadd.f32 %v199, %v264
    %v297 = vadd.f32 %v200, %v265
    %v298 = vadd.f32 %v201, %v266
    %v299 = vadd.f32 %v202, %v267
    %v300 = vadd.f32 %v203, %v268
    %v301 = vadd.f32 %v204, %v269
    %v302 = vadd.f32 %v205, %v270
    %v303 = vadd.f32 %v206, %v271
    %v304 = vadd.f32 %v207, %v272
    %v305 = vadd.f32 %v208, %v273
    %v306 = vadd.f32 %v209, %v274
    %v307 = vadd.f32 %v210, %v275
    %v308 = vadd.f32 %v211, %v276
    %v309 = vadd.f32 %v212, %v277
    %v310 = vadd.f32 %v213, %v278
    %v311 = vadd.f32 %v214, %v279
    %v312 = vadd.f32 %v215, %v280
    %v313 = vadd.f32 %v216, %v281
    %v314 = vadd.f32 %v217, %v282
    %v315 = vadd.f32 %v218, %v283
    %v316 = vadd.f32 %v219, %v284
    %v317 = vadd.f32 %v220, %v285
    %v318 = vadd.f32 %v221, %v286
    %v319 = vadd.f32 %v222, %v287
    %v320 = vadd.f32 %v223, %v288
    %v321 = vadd.f32 %v224, %v289
    %v322 = vadd.f32 %v225, %v290
    %v323 = vadd.f32 %v226, %v291
    %s324 = scalar_lea.vmem [#allocation2], 96
    %v325 = vld [vmem:[%s324] sm:$0xf]
    %v326 = vld [vmem:[%s324 + $0x4] sm:$0xf]
    %v327 = vld [vmem:[%s324 + $0x8] sm:$0xf]
    %v328 = vld [vmem:[%s324 + $0xc] sm:$0xf]
    %v329 = vld [vmem:[%s324 + $0x10] sm:$0xf]
    %v330 = vld [vmem:[%s324 + $0x14] sm:$0xf]
    %v331 = vld [vmem:[%s324 + $0x18] sm:$0xf]
    %v332 = vld [vmem:[%s324 + $0x1c] sm:$0xf]
    %v333 = vld [vmem:[%s324 + $0x80] sm:$0xf]
    %v334 = vld [vmem:[%s324 + $0x84] sm:$0xf]
    %v335 = vld [vmem:[%s324 + $0x88] sm:$0xf]
    %v336 = vld [vmem:[%s324 + $0x8c] sm:$0xf]
    %v337 = vld [vmem:[%s324 + $0x90] sm:$0xf]
    %v338 = vld [vmem:[%s324 + $0x94] sm:$0xf]
    %v339 = vld [vmem:[%s324 + $0x98] sm:$0xf]
    %v340 = vld [vmem:[%s324 + $0x9c] sm:$0xf]
    %v341 = vld [vmem:[%s324 + $0x100] sm:$0xf]
    %v342 = vld [vmem:[%s324 + $0x104] sm:$0xf]
    %v343 = vld [vmem:[%s324 + $0x108] sm:$0xf]
    %v344 = vld [vmem:[%s324 + $0x10c] sm:$0xf]
    %v345 = vld [vmem:[%s324 + $0x110] sm:$0xf]
    %v346 = vld [vmem:[%s324 + $0x114] sm:$0xf]
    %v347 = vld [vmem:[%s324 + $0x118] sm:$0xf]
    %v348 = vld [vmem:[%s324 + $0x11c] sm:$0xf]
    %v349 = vld [vmem:[%s324 + $0x180] sm:$0xf]
    %v350 = vld [vmem:[%s324 + $0x184] sm:$0xf]
    %v351 = vld [vmem:[%s324 + $0x188] sm:$0xf]
    %v352 = vld [vmem:[%s324 + $0x18c] sm:$0xf]
    %v353 = vld [vmem:[%s324 + $0x190] sm:$0xf]
    %v354 = vld [vmem:[%s324 + $0x194] sm:$0xf]
    %v355 = vld [vmem:[%s324 + $0x198] sm:$0xf]
    %v356 = vld [vmem:[%s324 + $0x19c] sm:$0xf]
    %v357 = vunpack.c.l.bf16 %v325
    %v358 = vunpack.c.l.bf16 %v326
    %v359 = vunpack.c.l.bf16 %v327
    %v360 = vunpack.c.l.bf16 %v328
    %v361 = vunpack.c.l.bf16 %v329
    %v362 = vunpack.c.l.bf16 %v330
    %v363 = vunpack.c.l.bf16 %v331
    %v364 = vunpack.c.l.bf16 %v332
    %v365 = vunpack.c.l.bf16 %v333
    %v366 = vunpack.c.l.bf16 %v334
    %v367 = vunpack.c.l.bf16 %v335
    %v368 = vunpack.c.l.bf16 %v336
    %v369 = vunpack.c.l.bf16 %v337
    %v370 = vunpack.c.l.bf16 %v338
    %v371 = vunpack.c.l.bf16 %v339
    %v372 = vunpack.c.l.bf16 %v340
    %v373 = vunpack.c.l.bf16 %v341
    %v374 = vunpack.c.l.bf16 %v342
    %v375 = vunpack.c.l.bf16 %v343
    %v376 = vunpack.c.l.bf16 %v344
    %v377 = vunpack.c.l.bf16 %v345
    %v378 = vunpack.c.l.bf16 %v346
    %v379 = vunpack.c.l.bf16 %v347
    %v380 = vunpack.c.l.bf16 %v348
    %v381 = vunpack.c.l.bf16 %v349
    %v382 = vunpack.c.l.bf16 %v350
    %v383 = vunpack.c.l.bf16 %v351
    %v384 = vunpack.c.l.bf16 %v352
    %v385 = vunpack.c.l.bf16 %v353
    %v386 = vunpack.c.l.bf16 %v354
    %v387 = vunpack.c.l.bf16 %v355
    %v388 = vunpack.c.l.bf16 %v356
    %v389 = vadd.f32 %v292, %v357
    %v390 = vadd.f32 %v293, %v358
    %v391 = vadd.f32 %v294, %v359
    %v392 = vadd.f32 %v295, %v360
    %v393 = vadd.f32 %v296, %v361
    %v394 = vadd.f32 %v297, %v362
    %v395 = vadd.f32 %v298, %v363
    %v396 = vadd.f32 %v299, %v364
    %v397 = vadd.f32 %v300, %v365
    %v398 = vadd.f32 %v301, %v366
    %v399 = vadd.f32 %v302, %v367
    %v400 = vadd.f32 %v303, %v368
    %v401 = vadd.f32 %v304, %v369
    %v402 = vadd.f32 %v305, %v370
    %v403 = vadd.f32 %v306, %v371
    %v404 = vadd.f32 %v307, %v372
    %v405 = vadd.f32 %v308, %v373
    %v406 = vadd.f32 %v309, %v374
    %v407 = vadd.f32 %v310, %v375
    %v408 = vadd.f32 %v311, %v376
    %v409 = vadd.f32 %v312, %v377
    %v410 = vadd.f32 %v313, %v378
    %v411 = vadd.f32 %v314, %v379
    %v412 = vadd.f32 %v315, %v380
    %v413 = vadd.f32 %v316, %v381
    %v414 = vadd.f32 %v317, %v382
    %v415 = vadd.f32 %v318, %v383
    %v416 = vadd.f32 %v319, %v384
    %v417 = vadd.f32 %v320, %v385
    %v418 = vadd.f32 %v321, %v386
    %v419 = vadd.f32 %v322, %v387
    %v420 = vadd.f32 %v323, %v388
    %v421 = vmul.f32 %v389, 0.25
    %v422 = vmul.f32 %v390, 0.25
    %v423 = vmul.f32 %v391, 0.25
    %v424 = vmul.f32 %v392, 0.25
    %v425 = vmul.f32 %v393, 0.25
    %v426 = vmul.f32 %v394, 0.25
    %v427 = vmul.f32 %v395, 0.25
    %v428 = vmul.f32 %v396, 0.25
    %v429 = vmul.f32 %v397, 0.25
    %v430 = vmul.f32 %v398, 0.25
    %v431 = vmul.f32 %v399, 0.25
    %v432 = vmul.f32 %v400, 0.25
    %v433 = vmul.f32 %v401, 0.25
    %v434 = vmul.f32 %v402, 0.25
    %v435 = vmul.f32 %v403, 0.25
    %v436 = vmul.f32 %v404, 0.25
    %v437 = vmul.f32 %v405, 0.25
    %v438 = vmul.f32 %v406, 0.25
    %v439 = vmul.f32 %v407, 0.25
    %v440 = vmul.f32 %v408, 0.25
    %v441 = vmul.f32 %v409, 0.25
    %v442 = vmul.f32 %v410, 0.25
    %v443 = vmul.f32 %v411, 0.25
    %v444 = vmul.f32 %v412, 0.25
    %v445 = vmul.f32 %v413, 0.25
    %v446 = vmul.f32 %v414, 0.25
    %v447 = vmul.f32 %v415, 0.25
    %v448 = vmul.f32 %v416, 0.25
    %v449 = vmul.f32 %v417, 0.25
    %v450 = vmul.f32 %v418, 0.25
    %v451 = vmul.f32 %v419, 0.25
    %v452 = vmul.f32 %v420, 0.25
    %v453 = vmax.f32 %v421, %v422
    %v454 = vmax.f32 %v453, %v423
    %v455 = vmax.f32 %v454, %v424
    %v456 = vmax.f32 %v455, %v425
    %v457 = vmax.f32 %v456, %v426
    %v458 = vmax.f32 %v457, %v427
    %v459 = vmax.f32 %v458, %v428
    %v460 = vrot.slane %v459, 4
    %v461 = vmax.f32 %v459, %v460
    %v462 = vrot.slane %v461, 2
    %v463 = vmax.f32 %v461, %v462
    %v464 = vrot.slane %v463, 1
    %v465 = vmax.f32 %v463, %v464
    %v466 = vmax.f32 %v429, %v430
    %v467 = vmax.f32 %v466, %v431
    %v468 = vmax.f32 %v467, %v432
    %v469 = vmax.f32 %v468, %v433
    %v470 = vmax.f32 %v469, %v434
    %v471 = vmax.f32 %v470, %v435
    %v472 = vmax.f32 %v471, %v436
    %v473 = vrot.slane %v472, 4
    %v474 = vmax.f32 %v472, %v473
    %v475 = vrot.slane %v474, 2
    %v476 = vmax.f32 %v474, %v475
    %v477 = vrot.slane %v476, 1
    %v478 = vmax.f32 %v476, %v477
    %v479 = vmax.f32 %v437, %v438
    %v480 = vmax.f32 %v479, %v439
    %v481 = vmax.f32 %v480, %v440
    %v482 = vmax.f32 %v481, %v441
    %v483 = vmax.f32 %v482, %v442
    %v484 = vmax.f32 %v483, %v443
    %v485 = vmax.f32 %v484, %v444
    %v486 = vrot.slane %v485, 4
    %v487 = vmax.f32 %v485, %v486
    %v488 = vrot.slane %v487, 2
    %v489 = vmax.f32 %v487, %v488
    %v490 = vrot.slane %v489, 1
    %v491 = vmax.f32 %v489, %v490
    %v492 = vmax.f32 %v445, %v446
    %v493 = vmax.f32 %v492, %v447
    %v494 = vmax.f32 %v493, %v448
    %v495 = vmax.f32 %v494, %v449
    %v496 = vmax.f32 %v495, %v450
    %v497 = vmax.f32 %v496, %v451
    %v498 = vmax.f32 %v497, %v452
    %v499 = vrot.slane %v498, 4
    %v500 = vmax.f32 %v498, %v499
    %v501 = vrot.slane %v500, 2
    %v502 = vmax.f32 %v500, %v501
    %v503 = vrot.slane %v502, 1
    %v504 = vmax.f32 %v502, %v503
    %vm509 = vcmask 1041409
    %v510 = vsel %vm509, %v478, %v465
    %vm511 = vcmask 1042434
    %v512 = vsel %vm511, %v491, %v510
    %vm513 = vcmask 1043459
    %v514 = vsel %vm513, %v504, %v512
    %516 = vst [vmem:[#allocation8] sm:$0xf] %v514
    %v517 = vpack.c.bf16 %v465, %v465
    %v518 = vpack.c.bf16 %v478, %v478
    %v519 = vpack.c.bf16 %v491, %v491
    %v520 = vpack.c.bf16 %v504, %v504
    %v521 = vld [vmem:[#allocation5] sm:$0xf]
    %v522 = vld [vmem:[#allocation5 + $0x4] sm:$0xf]
    %v523 = vld [vmem:[#allocation5 + $0x8] sm:$0xf]
    %v524 = vld [vmem:[#allocation5 + $0xc] sm:$0xf]
    %v525 = vld [vmem:[#allocation5 + $0x10] sm:$0xf]
    %v526 = vld [vmem:[#allocation5 + $0x14] sm:$0xf]
    %v527 = vld [vmem:[#allocation5 + $0x18] sm:$0xf]
    %v528 = vld [vmem:[#allocation5 + $0x1c] sm:$0xf]
    %v529 = vld [vmem:[#allocation5 + $0x20] sm:$0xf]
    %v530 = vld [vmem:[#allocation5 + $0x24] sm:$0xf]
    %v531 = vld [vmem:[#allocation5 + $0x28] sm:$0xf]
    %v532 = vld [vmem:[#allocation5 + $0x2c] sm:$0xf]
    %v533 = vld [vmem:[#allocation5 + $0x30] sm:$0xf]
    %v534 = vld [vmem:[#allocation5 + $0x34] sm:$0xf]
    %v535 = vld [vmem:[#allocation5 + $0x38] sm:$0xf]
    %v536 = vld [vmem:[#allocation5 + $0x3c] sm:$0xf]
    %v537 = vld [vmem:[%s2] sm:$0x1]
    %v539 = vlaneseq
    %v540 = vshrl.u32 %v539, 7
    %v541 = vsub.s32 0, %v540
    %v542 = vrot.slane %v537, %v541
    %v548 = vunpack.c.l.b16 %v517
    %v549 = vunpack.c.l.b16 %v518
    %v550 = vunpack.c.l.b16 %v519
    %v551 = vunpack.c.l.b16 %v520
    %v552 = vsel %vm509, %v549, %v548
    %v553 = vsel %vm511, %v550, %v552
    %v554 = vsel %vm513, %v551, %v553
    %v555 = vpack.c.b16 %v554, %v554
    %v573 = vunpack.c.l.b16 %v521
    %v574 = vunpack.c.l.b16 %v522
    %v575 = vunpack.c.l.b16 %v523
    %v576 = vunpack.c.l.b16 %v524
    %v577 = vunpack.c.l.b16 %v525
    %v578 = vunpack.c.l.b16 %v526
    %v579 = vunpack.c.l.b16 %v527
    %v580 = vunpack.c.l.b16 %v528
    %v581 = vunpack.c.l.b16 %v529
    %v582 = vunpack.c.l.b16 %v530
    %v583 = vunpack.c.l.b16 %v531
    %v584 = vunpack.c.l.b16 %v532
    %v585 = vunpack.c.l.b16 %v533
    %v586 = vunpack.c.l.b16 %v534
    %v587 = vunpack.c.l.b16 %v535
    %v588 = vunpack.c.l.b16 %v536
    %v589 = vpack.c.b16 %v574, %v573
    %v590 = vpack.c.b16 %v576, %v575
    %v591 = vpack.c.b16 %v578, %v577
    %v592 = vpack.c.b16 %v580, %v579
    %v593 = vpack.c.b16 %v582, %v581
    %v594 = vpack.c.b16 %v584, %v583
    %v595 = vpack.c.b16 %v586, %v585
    %v596 = vpack.c.b16 %v588, %v587
    %605 = vmatprep.subr.bf16.mxu0 0
    %606 = vmatpush1.bf16.msra.mxu0 %v589
    %607 = vmatprep.subr.bf16.mxu0 0
    %608 = vmatpush1.bf16.msra.mxu0 %v590
    %609 = vmatprep.subr.bf16.mxu0 0
    %610 = vmatpush1.bf16.msra.mxu0 %v591
    %611 = vmatprep.subr.bf16.mxu0 0
    %612 = vmatpush1.bf16.msra.mxu0 %v592
    %613 = vmatprep.subr.bf16.mxu0 0
    %614 = vmatpush1.bf16.msra.mxu0 %v593
    %615 = vmatprep.subr.bf16.mxu0 0
    %616 = vmatpush1.bf16.msra.mxu0 %v594
    %617 = vmatprep.subr.bf16.mxu0 0
    %618 = vmatpush1.bf16.msra.mxu0 %v595
    %619 = vmatprep.subr.bf16.mxu0 0
    %620 = vmatpush1.bf16.msra.mxu0 %v596
    %621 = vmatprep.subr.bf16.mxu0 0
    %622 = vmatpush1.bf16.msra.mxu0 0
    %623 = vmatprep.subr.bf16.mxu0 0
    %624 = vmatpush1.bf16.msra.mxu0 0
    %625 = vmatprep.subr.bf16.mxu0 0
    %626 = vmatpush1.bf16.msra.mxu0 0
    %627 = vmatprep.subr.bf16.mxu0 0
    %628 = vmatpush1.bf16.msra.mxu0 0
    %629 = vmatprep.subr.bf16.mxu0 0
    %630 = vmatpush1.bf16.msra.mxu0 0
    %631 = vmatprep.subr.bf16.mxu0 0
    %632 = vmatpush1.bf16.msra.mxu0 0
    %633 = vmatprep.subr.bf16.mxu0 0
    %634 = vmatpush1.bf16.msra.mxu0 0
    %635 = vmatprep.subr.bf16.mxu0 0
    %636 = vmatpush1.bf16.msra.mxu0 0
    %637 = vmatprep.mubr.bf16.mxu0 0
    %638 = vmatmul.mubr.bf16.gmra.mrb[0].mxu0 %v555
    %v639 = vpop.f32.mrb[0].mxu0
    %v640 = vadd.f32 %v542, %v639
    %v641 = vpop.f32.mrb[0].mxu0
    %v642 = vpop.f32.mrb[0].mxu0
    %v643 = vpop.f32.mrb[0].mxu0
    %644 = vdwg.mxu0
    %v645 = vmax.f32 %v640, 0.0
    %v646 = vpack.c.bf16 %v645, %v645
    %v647 = vld [vmem:[#allocation7] sm:$0xf]
    %v648 = vld [vmem:[#allocation7 + $0x4] sm:$0xf]
    %v649 = vld [vmem:[#allocation7 + $0x8] sm:$0xf]
    %v650 = vld [vmem:[#allocation7 + $0xc] sm:$0xf]
    %v651 = vld [vmem:[#allocation7 + $0x10] sm:$0xf]
    %v652 = vld [vmem:[#allocation7 + $0x14] sm:$0xf]
    %v653 = vld [vmem:[#allocation7 + $0x18] sm:$0xf]
    %v654 = vld [vmem:[#allocation7 + $0x1c] sm:$0xf]
    %v655 = vld [vmem:[#allocation7 + $0x20] sm:$0xf]
    %v656 = vld [vmem:[#allocation7 + $0x24] sm:$0xf]
    %v657 = vld [vmem:[#allocation7 + $0x28] sm:$0xf]
    %v658 = vld [vmem:[#allocation7 + $0x2c] sm:$0xf]
    %v659 = vld [vmem:[#allocation7 + $0x30] sm:$0xf]
    %v660 = vld [vmem:[#allocation7 + $0x34] sm:$0xf]
    %v661 = vld [vmem:[#allocation7 + $0x38] sm:$0xf]
    %v662 = vld [vmem:[#allocation7 + $0x3c] sm:$0xf]
    %v663 = vld [vmem:[%s4] sm:$0x1]
    %v665 = vlaneseq
    %v666 = vshrl.u32 %v665, 7
    %v667 = vsub.s32 0, %v666
    %v668 = vrot.slane %v663, %v667
    %v686 = vunpack.c.l.b16 %v647
    %v687 = vunpack.c.l.b16 %v648
    %v688 = vunpack.c.l.b16 %v649
    %v689 = vunpack.c.l.b16 %v650
    %v690 = vunpack.c.l.b16 %v651
    %v691 = vunpack.c.l.b16 %v652
    %v692 = vunpack.c.l.b16 %v653
    %v693 = vunpack.c.l.b16 %v654
    %v694 = vunpack.c.l.b16 %v655
    %v695 = vunpack.c.l.b16 %v656
    %v696 = vunpack.c.l.b16 %v657
    %v697 = vunpack.c.l.b16 %v658
    %v698 = vunpack.c.l.b16 %v659
    %v699 = vunpack.c.l.b16 %v660
    %v700 = vunpack.c.l.b16 %v661
    %v701 = vunpack.c.l.b16 %v662
    %v702 = vpack.c.b16 %v687, %v686
    %v703 = vpack.c.b16 %v689, %v688
    %v704 = vpack.c.b16 %v691, %v690
    %v705 = vpack.c.b16 %v693, %v692
    %v706 = vpack.c.b16 %v695, %v694
    %v707 = vpack.c.b16 %v697, %v696
    %v708 = vpack.c.b16 %v699, %v698
    %v709 = vpack.c.b16 %v701, %v700
    %718 = vmatprep.subr.bf16.mxu0 0
    %719 = vmatpush1.bf16.msra.mxu0 %v702
    %720 = vmatprep.subr.bf16.mxu0 0
    %721 = vmatpush1.bf16.msra.mxu0 %v703
    %722 = vmatprep.subr.bf16.mxu0 0
    %723 = vmatpush1.bf16.msra.mxu0 %v704
    %724 = vmatprep.subr.bf16.mxu0 0
    %725 = vmatpush1.bf16.msra.mxu0 %v705
    %726 = vmatprep.subr.bf16.mxu0 0
    %727 = vmatpush1.bf16.msra.mxu0 %v706
    %728 = vmatprep.subr.bf16.mxu0 0
    %729 = vmatpush1.bf16.msra.mxu0 %v707
    %730 = vmatprep.subr.bf16.mxu0 0
    %731 = vmatpush1.bf16.msra.mxu0 %v708
    %732 = vmatprep.subr.bf16.mxu0 0
    %733 = vmatpush1.bf16.msra.mxu0 %v709
    %734 = vmatprep.subr.bf16.mxu0 0
    %735 = vmatpush1.bf16.msra.mxu0 0
    %736 = vmatprep.subr.bf16.mxu0 0
    %737 = vmatpush1.bf16.msra.mxu0 0
    %738 = vmatprep.subr.bf16.mxu0 0
    %739 = vmatpush1.bf16.msra.mxu0 0
    %740 = vmatprep.subr.bf16.mxu0 0
    %741 = vmatpush1.bf16.msra.mxu0 0
    %742 = vmatprep.subr.bf16.mxu0 0
    %743 = vmatpush1.bf16.msra.mxu0 0
    %744 = vmatprep.subr.bf16.mxu0 0
    %745 = vmatpush1.bf16.msra.mxu0 0
    %746 = vmatprep.subr.bf16.mxu0 0
    %747 = vmatpush1.bf16.msra.mxu0 0
    %748 = vmatprep.subr.bf16.mxu0 0
    %749 = vmatpush1.bf16.msra.mxu0 0
    %750 = vmatprep.mubr.bf16.mxu0 0
    %751 = vmatmul.mubr.bf16.gmra.mrb[0].mxu0 %v646
    %v752 = vpop.f32.mrb[0].mxu0
    %v753 = vadd.f32 %v668, %v752
    %v754 = vpop.f32.mrb[0].mxu0
    %v755 = vpop.f32.mrb[0].mxu0
    %v756 = vpop.f32.mrb[0].mxu0
    %757 = vdwg.mxu0
    %v758 = vmax.f32 %v753, 0.0
    %759 = vst [vmem:[#allocation9] sm:$0xf] %v758
    // Predicated region
    $region34: #{tpu_custom_call.1} parent=1 // pred_check
      _
    $region35: #{tpu_custom_call.1} parent=1 // pred_check_branch
      %761 = sbr.rel (0) target = $region37
    $region36: #{tpu_custom_call.1} parent=1 // pred_region
      %s763 = ssub.s32 64, 64
      %764 = vsyncadd [#allocation4], %s763
      %s766 = sshll.u32 [#allocation8], 4
      %s767 = int_to_ptr.vmem [resolvable:$true] %s766
      %769 = dma.vmem_to_hbm [thread:$0]  %s767, 64, %s5, [#allocation4]
    $region37: #{tpu_custom_call.1} parent=1 // pred_fallthru
      _
    // Predicated region
    $region38: #{tpu_custom_call.1} parent=1 // pred_check
      _
    $region39: #{tpu_custom_call.1} parent=1 // pred_check_branch
      %771 = sbr.rel (0) target = $region41
    $region40: #{tpu_custom_call.1} parent=1 // pred_region
      %s773 = ssub.s32 64, 64
      %774 = vsyncadd [#allocation10], %s773
      %s776 = sshll.u32 [#allocation9], 4
      %s777 = int_to_ptr.vmem [resolvable:$true] %s776
      %779 = dma.vmem_to_hbm [thread:$0]  %s777, 64, %s6, [#allocation10]
    $region41: #{tpu_custom_call.1} parent=1 // pred_fallthru
      _
    // Predicated region
    $region42: #{tpu_custom_call.1} parent=1 // pred_check
      _
    $region43: #{tpu_custom_call.1} parent=1 // pred_check_branch
      %781 = sbr.rel (0) target = $region45
    $region44: #{tpu_custom_call.1} parent=1 // pred_region
      %782 = dma.done [#allocation4], 64
    $region45: #{tpu_custom_call.1} parent=1 // pred_fallthru
      _
    // Predicated region
    $region46: #{tpu_custom_call.1} parent=1 // pred_check
      _
    $region47: #{tpu_custom_call.1} parent=1 // pred_check_branch
      %784 = sbr.rel (0) target = $region49
    $region48: #{tpu_custom_call.1} parent=1 // pred_region
      %785 = dma.done [#allocation10], 64
    $region49: #{tpu_custom_call.1} parent=1 // pred_fallthru
      _
    %786 = vsyncpa [#allocation3], 1
    %787 = vsyncpa [#allocation6], 1
    %788 = vsyncpa [#allocation4], 1
    %789 = vsyncpa [#allocation10], 1

</llo_original>
